<compile_context>
chip_gen: v6e
topology: v6e:2x2x1
jax: 0.10.0
libtpu: 0.0.40
codegen_flags: <defaults>
</compile_context>

<pallas_src>
import math

import jax
import jax.numpy as jnp
from jax.experimental import pallas as pl
from jax.experimental.pallas import tpu as pltpu


# ----------------------------------------------------------------------------- #
# Kernels
# ----------------------------------------------------------------------------- #
def _gelu_tanh(x):
    # Matches F.gelu(x, approximate='tanh')
    c = math.sqrt(2.0 / math.pi)
    return 0.5 * x * (1.0 + jnp.tanh(c * (x + 0.044715 * x * x * x)))


def _gate_up_fuse(x, wgu, bgu, ti, fuse_dtype):
    # One MXU burst for gate+up; wgu columns are [Wg tile | Wu tile] (each ti wide,
    # ti a multiple of 128 -> the split below is lane-aligned).
    z = jnp.dot(x, wgu, preferred_element_type=jnp.float32)
    z = z + bgu.astype(jnp.float32)
    gate = _gelu_tanh(z[:, :ti])
    up = z[:, ti:]
    return (gate * up).astype(fuse_dtype)


def _mlp_resident_kernel(x_ref, wgu_ref, bgu_ref, wd_ref, bd_ref, o_ref):
    # Weight-resident fast path: grid = (M tiles,), weights DMA'd once.
    ti = wd_ref.shape[0]
    fuse = _gate_up_fuse(x_ref[...], wgu_ref[...], bgu_ref[...], ti, wd_ref.dtype)
    out = jnp.dot(fuse, wd_ref[...], preferred_element_type=jnp.float32)
    o_ref[...] = (out + bd_ref[...].astype(jnp.float32)).astype(o_ref.dtype)


def _mlp_stream_acc_kernel(x_ref, wgu_ref, bgu_ref, wd_ref, bd_ref, o_ref, acc_ref):
    # Streaming path with a separate f32 accumulator (used when out dtype < f32).
    j = pl.program_id(1)
    ti = wd_ref.shape[0]

    @pl.when(j == 0)
    def _init():
        acc_ref[...] = jnp.zeros_like(acc_ref)

    fuse = _gate_up_fuse(x_ref[...], wgu_ref[...], bgu_ref[...], ti, wd_ref.dtype)
    acc_ref[...] += jnp.dot(fuse, wd_ref[...], preferred_element_type=jnp.float32)

    @pl.when(j == pl.num_programs(1) - 1)
    def _fin():
        o_ref[...] = (acc_ref[...] + bd_ref[...].astype(jnp.float32)
                      ).astype(o_ref.dtype)


def _mlp_stream_f32_kernel(x_ref, wgu_ref, bgu_ref, wd_ref, bd_ref, o_ref):
    # Streaming path, f32 output: accumulate directly into the VMEM-resident
    # output block (saves tm*D*4 bytes of scratch; valuable on v7x's 64 MiB).
    j = pl.program_id(1)
    ti = wd_ref.shape[0]

    @pl.when(j == 0)
    def _init():
        o_ref[...] = jnp.broadcast_to(bd_ref[...].astype(o_ref.dtype), o_ref.shape)

    fuse = _gate_up_fuse(x_ref[...], wgu_ref[...], bgu_ref[...], ti, wd_ref.dtype)
    o_ref[...] += jnp.dot(fuse, wd_ref[...], preferred_element_type=jnp.float32)


# ----------------------------------------------------------------------------- #
# Host-side helpers
# ----------------------------------------------------------------------------- #
def _round_up(n, m):
    return ((n + m - 1) // m) * m


def _vmem_capacity_bytes():
    try:
        info = pltpu.get_tpu_info()
        cap = int(getattr(info, "vmem_capacity_bytes", 0))
        if cap > 0:
            return cap
    except Exception:
        pass
    return 64 * 1024 * 1024  # conservative fallback (safe on every generation)


def _select_tiles(M, D_pad, I_pad, itemsize_x, itemsize_w, *, tm_req, row_align,
                  budget, max_ti=None, allow_resident=True):
    """Pick (tm, ti, resident). ti divides I_pad; everything stays inside budget."""

    def fits(tm_, ti_, streaming):
        act = 4 * tm_ * D_pad * itemsize_x          # x + out, double-buffered
        act += 5 * tm_ * ti_ * 4                    # f32 z/gate/up/fuse temporaries
        if streaming:
            act += 4 * tm_ * D_pad                  # f32 accumulator (worst case)
        w = 2 * (3 * D_pad * ti_ + 2 * ti_ + D_pad) * itemsize_w  # dbl-buffered slabs
        return act + w <= budget

    # Lane-aligned ti candidates that divide I_pad (so padding stays at 128).
    n128 = I_pad // 128
    ti_cands = sorted({128 * k for k in range(1, n128 + 1) if n128 % k == 0},
                      reverse=True)
    if max_ti is not None:
        ti_cands = [t for t in ti_cands if t <= max_ti] or [ti_cands[-1]]

    tm = max(row_align, min(tm_req, _round_up(M, row_align)))
    if M > row_align:
        # >=2 row tiles so a dual-TensorCore chip (v7x) can split the token axis.
        tm = min(tm, _round_up((M + 1) // 2, row_align))

    while True:
        if allow_resident and ti_cands[0] == I_pad and fits(tm, I_pad, False):
            return tm, I_pad, True
        for ti in ti_cands:
            if ti == I_pad and allow_resident:
                continue  # streaming with ti == I_pad is strictly worse than resident
            if fits(tm, ti, True):
                return tm, ti, False
        if tm <= row_align:
            return tm, ti_cands[-1], False
        tm = max(row_align, _round_up(tm // 2, row_align))  # drop ti before tm


def mlp_pallas(x, params, *, tm=512, max_ti=None, force_streaming=False,
               vmem_limit_bytes=None):
    """x: [B, T, D] -> [B, T, D].  params = (Wg^T, bg, Wu^T, bu, Wd^T, bd)."""
    wg_t, bg, wu_t, bu, wd_t, bd = params   # [D,I],[I],[D,I],[I],[I,D],[D]
    B, T, D = x.shape
    I = wg_t.shape[1]
    M = B * T

    itemsize_x = jnp.dtype(x.dtype).itemsize
    itemsize_w = jnp.dtype(wg_t.dtype).itemsize

    if vmem_limit_bytes is None:
        # Leave headroom below physical VMEM (critical on v7x, where it is 64 MiB).
        vmem_limit_bytes = int(_vmem_capacity_bytes() * 0.85)
    budget = int(vmem_limit_bytes * 0.8)     # headroom for Mosaic internal scratch

    # Pad D to a lane-dense multiple of 128 (unmasked vst) and I to 128.
    D_pad = _round_up(D, 128)
    I_pad = _round_up(I, 128)
    row_align = 16 if itemsize_x < 4 else 8  # bf16 vregs pack (16, 128)

    tm_eff, ti_eff, resident = _select_tiles(
        M, D_pad, I_pad, itemsize_x, itemsize_w, tm_req=tm, row_align=row_align,
        budget=budget, max_ti=max_ti, allow_resident=not force_streaming)
    M_pad = _round_up(M, tm_eff)
    nI = I_pad // ti_eff
    n_row = M_pad // tm_eff

    # --- host-side packing.  Zero padding keeps the math exact: padded I columns
    # give gelu(0)*0 == 0, padded Wd rows are zero, padded D columns/M rows are
    # sliced off the output. ---
    x2d = x.reshape(M, D)
    if M_pad != M or D_pad != D:
        x2d = jnp.pad(x2d, ((0, M_pad - M), (0, D_pad - D)))
    if D_pad != D or I_pad != I:
        wg_t = jnp.pad(wg_t, ((0, D_pad - D), (0, I_pad - I)))
        wu_t = jnp.pad(wu_t, ((0, D_pad - D), (0, I_pad - I)))
        wd_t = jnp.pad(wd_t, ((0, I_pad - I), (0, D_pad - D)))
        bg = jnp.pad(bg, ((0, I_pad - I),))
        bu = jnp.pad(bu, ((0, I_pad - I),))
        bd = jnp.pad(bd, ((0, D_pad - D),))

    # Fuse gate/up weights into one operand, interleaved per ti-wide tile:
    # columns [2*j*ti, 2*j*ti+ti) = Wg tile j, next ti columns = Wu tile j.
    wgu = jnp.concatenate(
        [wg_t.reshape(D_pad, nI, 1, ti_eff), wu_t.reshape(D_pad, nI, 1, ti_eff)],
        axis=2).reshape(D_pad, 2 * I_pad)
    bgu = jnp.concatenate(
        [bg.reshape(nI, 1, ti_eff), bu.reshape(nI, 1, ti_eff)],
        axis=1).reshape(1, 2 * I_pad)
    bd2 = bd.reshape(1, D_pad)

    weight_passes = 1 if resident else n_row
    cost = pl.CostEstimate(
        flops=int(6 * M_pad * D_pad * I_pad),
        transcendentals=int(M_pad * I_pad),
        bytes_accessed=int(itemsize_x * 2 * M_pad * D_pad
                           + itemsize_w * weight_passes
                           * (3 * D_pad * I_pad + 2 * I_pad + D_pad)),
    )

    if resident:
        kernel = _mlp_resident_kernel
        grid = (n_row,)
        in_specs = [
            pl.BlockSpec((tm_eff, D_pad), lambda i: (i, 0)),      # x tile
            pl.BlockSpec((D_pad, 2 * I_pad), lambda i: (0, 0)),   # fused Wg|Wu (resident)
            pl.BlockSpec((1, 2 * I_pad), lambda i: (0, 0)),       # fused bg|bu
            pl.BlockSpec((I_pad, D_pad), lambda i: (0, 0)),       # Wd^T (resident)
            pl.BlockSpec((1, D_pad), lambda i: (0, 0)),           # bd
        ]
        out_specs = pl.BlockSpec((tm_eff, D_pad), lambda i: (i, 0))
        scratch_shapes = []
        semantics = ("parallel",)
    else:
        if jnp.dtype(x.dtype) == jnp.dtype(jnp.float32):
            kernel = _mlp_stream_f32_kernel
            scratch_shapes = []
        else:
            kernel = _mlp_stream_acc_kernel
            scratch_shapes = [pltpu.VMEM((tm_eff, D_pad), jnp.float32)]
        grid = (n_row, nI)
        in_specs = [
            pl.BlockSpec((tm_eff, D_pad), lambda i, j: (i, 0)),     # x tile
            pl.BlockSpec((D_pad, 2 * ti_eff), lambda i, j: (0, j)),  # fused Wg|Wu slab
            pl.BlockSpec((1, 2 * ti_eff), lambda i, j: (0, j)),      # fused bg|bu slab
            pl.BlockSpec((ti_eff, D_pad), lambda i, j: (j, 0)),      # Wd^T slab
            pl.BlockSpec((1, D_pad), lambda i, j: (0, 0)),           # bd
        ]
        out_specs = pl.BlockSpec((tm_eff, D_pad), lambda i, j: (i, 0))
        semantics = ("parallel", "arbitrary")

    out2d = pl.pallas_call(
        kernel,
        out_shape=jax.ShapeDtypeStruct((M_pad, D_pad), x.dtype),
        grid_spec=pltpu.PrefetchScalarGridSpec(
            num_scalar_prefetch=0,
            grid=grid,
            in_specs=in_specs,
            out_specs=out_specs,
            scratch_shapes=scratch_shapes,
        ),
        compiler_params=pltpu.CompilerParams(
            dimension_semantics=semantics,
            vmem_limit_bytes=int(vmem_limit_bytes),
        ),
        cost_estimate=cost,
    )(x2d, wgu, bgu, wd_t, bd2)

    return out2d[:M, :D].reshape(B, T, D)


# ----------------------------------------------------------------------------- #
# Reference + demo
# ----------------------------------------------------------------------------- #
def init_params(key, dim, intermediate, dtype=jnp.float32):
    """nn.Linear-style init (uniform +/- 1/sqrt(fan_in)); weights pre-transposed."""
    ks = jax.random.split(key, 6)
    lim_h = 1.0 / math.sqrt(dim)
    lim_i = 1.0 / math.sqrt(intermediate)

    def u(k, shape, lim):
        return jax.random.uniform(k, shape, jnp.float32, -lim, lim).astype(dtype)

    wg_t = u(ks[0], (dim, intermediate), lim_h)
    bg = u(ks[1], (intermediate,), lim_h)
    wu_t = u(ks[2], (dim, intermediate), lim_h)
    bu = u(ks[3], (intermediate,), lim_h)
    wd_t = u(ks[4], (intermediate, dim), lim_i)
    bd = u(ks[5], (dim,), lim_i)
    return (wg_t, bg, wu_t, bu, wd_t, bd)


def mlp_reference(x, params):
    wg_t, bg, wu_t, bu, wd_t, bd = params
    xf = x.astype(jnp.float32)
    gate = _gelu_tanh(xf @ wg_t.astype(jnp.float32) + bg.astype(jnp.float32))
    up = xf @ wu_t.astype(jnp.float32) + bu.astype(jnp.float32)
    out = (gate * up) @ wd_t.astype(jnp.float32) + bd.astype(jnp.float32)
    return out.astype(x.dtype)


if __name__ == "__main__":
    key = jax.random.PRNGKey(0)

    def run_case(idx, dtype, B, T, D, scale, tol, **kw):
        I = D * scale
        kx, kp = jax.random.split(jax.random.fold_in(key, idx))
        x = jax.random.normal(kx, (B, T, D), jnp.float32).astype(dtype)
        params = init_params(kp, D, I, dtype=dtype)
        out = jax.block_until_ready(mlp_pallas(x, params, **kw))
        ref = mlp_reference(x, params)
        assert out.shape == (B, T, D)
        o32 = out.astype(jnp.float32)
        r32 = ref.astype(jnp.float32)
        assert jnp.allclose(o32, r32, atol=tol, rtol=tol), (
            idx, float(jnp.max(jnp.abs(o32 - r32))))

    # 1) dim=32, mlp_scale=4 -> intermediate=128: weight-resident fast path.
    run_case(0, jnp.float32, 2, 8, 32, 4, 1e-4)
    # 2) forced streaming over the intermediate dim, f32 (accumulate into output).
    run_case(1, jnp.float32, 2, 8, 32, 8, 1e-4, force_streaming=True, max_ti=128)
    # 3) forced streaming, bf16 operands (f32 VMEM accumulator; loose tolerance).
    run_case(2, jnp.bfloat16, 2, 8, 32, 8, 5e-2, force_streaming=True, max_ti=128)

    print("KERNEL_OK")
</pallas_src>

<mosaic_0001>
module attributes {stable_mosaic.version = 11 : i64} {
  func.func @_mlp_resident_kernel(%arg0: i32, %arg1: memref<8x128xf32, #tpu.memory_space<vmem>>, %arg2: memref<128x256xf32, #tpu.memory_space<vmem>>, %arg3: memref<1x256xf32, #tpu.memory_space<vmem>>, %arg4: memref<128x128xf32, #tpu.memory_space<vmem>>, %arg5: memref<1x128xf32, #tpu.memory_space<vmem>>, %arg6: memref<8x128xf32, #tpu.memory_space<vmem>>) attributes {dimension_semantics = [#tpu.dimension_semantics<parallel>], iteration_bounds = array<i64: 2>, scalar_prefetch = 0 : i64, scratch_operands = 0 : i64, tpu.core_type = #tpu.core_type<tc>, window_params = [{transform_indices = @transform_0, window_bounds = array<i64: 8, 128>}, {pipeline_mode = #tpu.pipeline_mode<synchronous>, transform_indices = @transform_1, window_bounds = array<i64: 128, 256>}, {pipeline_mode = #tpu.pipeline_mode<synchronous>, transform_indices = @transform_2, window_bounds = array<i64: 1, 256>}, {pipeline_mode = #tpu.pipeline_mode<synchronous>, transform_indices = @transform_3, window_bounds = array<i64: 128, 128>}, {pipeline_mode = #tpu.pipeline_mode<synchronous>, transform_indices = @transform_4, window_bounds = array<i64: 1, 128>}, {transform_indices = @transform_5, window_bounds = array<i64: 8, 128>}]} {
    %c0 = arith.constant 0 : index
    %c0_0 = arith.constant 0 : index
    %0 = vector.load %arg1[%c0, %c0_0] : memref<8x128xf32, #tpu.memory_space<vmem>>, vector<8x128xf32>
    %c0_1 = arith.constant 0 : index
    %c0_2 = arith.constant 0 : index
    %1 = vector.load %arg2[%c0_1, %c0_2] : memref<128x256xf32, #tpu.memory_space<vmem>>, vector<128x256xf32>
    %c0_3 = arith.constant 0 : index
    %c0_4 = arith.constant 0 : index
    %2 = vector.load %arg3[%c0_3, %c0_4] : memref<1x256xf32, #tpu.memory_space<vmem>>, vector<1x256xf32>
    %cst = arith.constant dense<0.000000e+00> : vector<8x256xf32>
    %3 = tpu.matmul %0, %1, %cst {dimension_numbers = #tpu.dot_dimension_numbers<[1], [0], [0], [1], [0, 0, 1, 1], [], []>} : vector<8x128xf32>, vector<128x256xf32>, vector<8x256xf32> -> vector<8x256xf32>
    %4 = vector.broadcast %2 : vector<1x256xf32> to vector<8x256xf32>
    %5 = arith.addf %3, %4 : vector<8x256xf32>
    %6 = vector.extract_strided_slice %5 {offsets = [0, 0], sizes = [8, 128], strides = [1, 1]} : vector<8x256xf32> to vector<8x128xf32>
    %cst_5 = arith.constant 5.000000e-01 : f32
    %7 = vector.broadcast %cst_5 : f32 to vector<8x128xf32>
    %8 = arith.mulf %7, %6 : vector<8x128xf32>
    %cst_6 = arith.constant 4.471500e-02 : f32
    %9 = vector.broadcast %cst_6 : f32 to vector<8x128xf32>
    %10 = arith.mulf %9, %6 : vector<8x128xf32>
    %11 = arith.mulf %10, %6 : vector<8x128xf32>
    %12 = arith.mulf %11, %6 : vector<8x128xf32>
    %13 = arith.addf %6, %12 : vector<8x128xf32>
    %cst_7 = arith.constant 0.797884583 : f32
    %14 = vector.broadcast %cst_7 : f32 to vector<8x128xf32>
    %15 = arith.mulf %14, %13 : vector<8x128xf32>
    %16 = math.tanh %15 : vector<8x128xf32>
    %cst_8 = arith.constant 1.000000e+00 : f32
    %17 = vector.broadcast %cst_8 : f32 to vector<8x128xf32>
    %18 = arith.addf %17, %16 : vector<8x128xf32>
    %19 = arith.mulf %8, %18 : vector<8x128xf32>
    %20 = vector.extract_strided_slice %5 {offsets = [0, 128], sizes = [8, 128], strides = [1, 1]} : vector<8x256xf32> to vector<8x128xf32>
    %21 = arith.mulf %19, %20 : vector<8x128xf32>
    %c0_9 = arith.constant 0 : index
    %c0_10 = arith.constant 0 : index
    %22 = vector.load %arg4[%c0_9, %c0_10] : memref<128x128xf32, #tpu.memory_space<vmem>>, vector<128x128xf32>
    %cst_11 = arith.constant dense<0.000000e+00> : vector<8x128xf32>
    %23 = tpu.matmul %21, %22, %cst_11 {dimension_numbers = #tpu.dot_dimension_numbers<[1], [0], [0], [1], [0, 0, 1, 1], [], []>} : vector<8x128xf32>, vector<128x128xf32>, vector<8x128xf32> -> vector<8x128xf32>
    %c0_12 = arith.constant 0 : index
    %c0_13 = arith.constant 0 : index
    %24 = vector.load %arg5[%c0_12, %c0_13] : memref<1x128xf32, #tpu.memory_space<vmem>>, vector<1x128xf32>
    %25 = vector.broadcast %24 : vector<1x128xf32> to vector<8x128xf32>
    %26 = arith.addf %23, %25 : vector<8x128xf32>
    %c0_14 = arith.constant 0 : index
    %c0_15 = arith.constant 0 : index
    %27 = vector.load %arg6[%c0_14, %c0_15] : memref<8x128xf32, #tpu.memory_space<vmem>>, vector<8x128xf32>
    tpu.vector_store %arg6[%c0_14, %c0_15], %26 {strides = array<i32>} : memref<8x128xf32, #tpu.memory_space<vmem>>, vector<8x128xf32>,
    return
  }
  func.func @transform_0(%arg0: i32) -> (i32, i32) {
    %c0_i32 = arith.constant 0 : i32
    %c0_i32_0 = arith.constant 0 : i32
    return %arg0, %c0_i32 : i32, i32
  }
  func.func @transform_1(%arg0: i32) -> (i32, i32) {
    %c0_i32 = arith.constant 0 : i32
    %c0_i32_0 = arith.constant 0 : i32
    %c0_i32_1 = arith.constant 0 : i32
    return %c0_i32, %c0_i32_0 : i32, i32
  }
  func.func @transform_2(%arg0: i32) -> (i32, i32) {
    %c0_i32 = arith.constant 0 : i32
    %c0_i32_0 = arith.constant 0 : i32
    %c0_i32_1 = arith.constant 0 : i32
    return %c0_i32, %c0_i32_0 : i32, i32
  }
  func.func @transform_3(%arg0: i32) -> (i32, i32) {
    %c0_i32 = arith.constant 0 : i32
    %c0_i32_0 = arith.constant 0 : i32
    %c0_i32_1 = arith.constant 0 : i32
    return %c0_i32, %c0_i32_0 : i32, i32
  }
  func.func @transform_4(%arg0: i32) -> (i32, i32) {
    %c0_i32 = arith.constant 0 : i32
    %c0_i32_0 = arith.constant 0 : i32
    %c0_i32_1 = arith.constant 0 : i32
    return %c0_i32, %c0_i32_0 : i32, i32
  }
  func.func @transform_5(%arg0: i32) -> (i32, i32) {
    %c0_i32 = arith.constant 0 : i32
    %c0_i32_0 = arith.constant 0 : i32
    return %arg0, %c0_i32 : i32, i32
  }
}

</mosaic_0001>

<llo_original>
// kernel: tpu_custom_call.1
$region0: #{tpu_custom_call.1}
  #allocation0 [shape = 'u32[]', space=smem, size = 0x4, offset = 0x4, fixed_abs, tag = 'smem constant byte address 0x4 - core index']
  #allocation1 [shape = 'u32[144,128]{1,0:T(1,128)}', space=vmem, size = 0x12000, scoped, tag = 'internal scratch']
  %s0 = inlined_call_operand.hbm [shape: f32[16,128], index: 0, kind: input, shape index: {}]
  %s1 = inlined_call_operand.hbm [shape: f32[128,256], index: 1, kind: input, shape index: {}]
  %s2 = inlined_call_operand.vmem [shape: f32[1,256], index: 2, kind: input, shape index: {}]
  %s3 = inlined_call_operand.hbm [shape: f32[128,128], index: 3, kind: input, shape index: {}]
  %s4 = inlined_call_operand.vmem [shape: f32[1,128], index: 4, kind: input, shape index: {}]
  %s5 = inlined_call_operand.hbm [shape: f32[16,128], index: 5, kind: output, shape index: {}]
  %s6 = sld [smem:[#allocation0]]
  $region65: #{tpu_custom_call.1} parent=0
    _
  %s8 = ssub.s32 1, %s6
  %s9 = scalar_select 0, %s8, %s6
  $region1: #{tpu_custom_call.1} parent=0
    #allocation2 [shape = 'u8[8192]{0}', space=vmem, size = 0x2000, scoped, tag = 'input window, operand 0']
    #allocation3 [shape = 's32[2]{0}', space=sflag, size = 0x8, scoped, tag = 'scoped memory for tpu_custom_call.1']
    #allocation4 [shape = 's32[2]{0}', space=sflag, size = 0x8, scoped, tag = 'scoped memory for tpu_custom_call.1']
    #allocation5 [shape = 'u8[131072]{0}', space=vmem, size = 0x20000, scoped, tag = 'input window, operand 1, single buffered']
    #allocation6 [shape = 's32[1]{0}', space=sflag, size = 0x4, scoped, tag = 'scoped memory for tpu_custom_call.1']
    #allocation7 [shape = 'u8[65536]{0}', space=vmem, size = 0x10000, scoped, tag = 'input window, operand 3, single buffered']
    #allocation8 [shape = 'u8[8192]{0}', space=vmem, size = 0x2000, scoped, tag = 'output window, operand 0']
    %10 = vsyncpa [#allocation3], 0
    %s11 = scalar_lea.sflag [#allocation3], 1
    %12 = vsyncpa %s11, 0
    %13 = vsyncpa [#allocation6], 0
    %14 = vsyncpa [#allocation4], 0
    %s15 = scalar_lea.sflag [#allocation4], 1
    %16 = vsyncpa %s15, 0
    loop: start=0, step=1, limit=4
    $region2: #{tpu_custom_call.1} parent=1 // loop_pre_header
      _
    $region3: #{tpu_custom_call.1} parent=1 // loop_header
      %s18 = sphi 0, %s22
      %p19 = scmp.ge.s32.totalorder %s18, 4
      %s28 = sphi 0, %s30
      %s31 = sphi 0, %s28
      %s32 = sphi 0, %s31
      %s48 = sphi 0, %s32
      %s52 = sphi 0, %s52
      %s54 = sphi 0, %s52
      %s55 = sphi 0, %s54
      %s69 = sphi 0, %s55
      %s73 = sphi 0, %s73
      %s75 = sphi 0, %s73
      %s76 = sphi 0, %s75
      %s90 = sphi 0, %s76
      %s94 = sphi 0, %s94
      %s96 = sphi 0, %s94
      %s97 = sphi 0, %s96
      %s111 = sphi 0, %s97
      %s115 = sphi 0, %s115
      %s117 = sphi 0, %s115
      %s118 = sphi 0, %s117
      %s132 = sphi 0, %s118
      %s138 = sphi 0, %s140
      %s141 = sphi 0, %s138
      %s142 = sphi 0, %s141
      %s158 = sphi 0, %s142
    $region4: #{tpu_custom_call.1} parent=1 // loop_header_branch
      %21 = sbr.rel (%p19) target = $region8
    $region5: #{tpu_custom_call.1} parent=1 // loop_body
      %s23 = ssub.s32 %s18, 1
      %s24 = ssub.s32 %s18, 2
      %s25 = sadd.s32 %s18, 1
      %s26 = ssub.s32 %s18, %s25
      %p27 = scmp.eq.s32.totalorder %s26, 0
      %s29 = sadd.s32 %s28, 1
      %s30 = scalar_select %p27, %s28, %s29
      %p33 = pneg %p27
      %p34 = scmp.eq.s32.totalorder %s18, 1
      %p35 = por %p33, %p34
      %p36 = scmp.ne.s32.totalorder %s28, %s31
      %p37 = scmp.eq.s32.totalorder %s18, 0
      %p38 = por %p36, %p37
      %p39 = scmp.ne.s32.totalorder %s28, %s31
      %p40 = scmp.eq.s32.totalorder %s23, 1
      %p41 = por %p39, %p40
      %p42 = scmp.ne.s32.totalorder %s31, %s32
      %p43 = scmp.eq.s32.totalorder %s23, 0
      %p44 = por %p42, %p43
      %p45 = scmp.ne.s32.totalorder %s31, %s32
      %p46 = scmp.eq.s32.totalorder %s24, 1
      %p47 = por %p45, %p46
      %p49 = scmp.ne.s32.totalorder %s32, %s48
      %p50 = scmp.eq.s32.totalorder %s24, 0
      %p51 = por %p49, %p50
      %s53 = sadd.s32 %s52, 1
      %p56 = scmp.eq.s32.totalorder %s18, 1
      %p57 = scmp.ne.s32.totalorder %s52, %s54
      %p58 = scmp.eq.s32.totalorder %s18, 0
      %p59 = por %p57, %p58
      %p60 = scmp.ne.s32.totalorder %s52, %s54
      %p61 = scmp.eq.s32.totalorder %s23, 1
      %p62 = por %p60, %p61
      %p63 = scmp.ne.s32.totalorder %s54, %s55
      %p64 = scmp.eq.s32.totalorder %s23, 0
      %p65 = por %p63, %p64
      %p66 = scmp.ne.s32.totalorder %s54, %s55
      %p67 = scmp.eq.s32.totalorder %s24, 1
      %p68 = por %p66, %p67
      %p70 = scmp.ne.s32.totalorder %s55, %s69
      %p71 = scmp.eq.s32.totalorder %s24, 0
      %p72 = por %p70, %p71
      %s74 = sadd.s32 %s73, 1
      %p77 = scmp.eq.s32.totalorder %s18, 1
      %p78 = scmp.ne.s32.totalorder %s73, %s75
      %p79 = scmp.eq.s32.totalorder %s18, 0
      %p80 = por %p78, %p79
      %p81 = scmp.ne.s32.totalorder %s73, %s75
      %p82 = scmp.eq.s32.totalorder %s23, 1
      %p83 = por %p81, %p82
      %p84 = scmp.ne.s32.totalorder %s75, %s76
      %p85 = scmp.eq.s32.totalorder %s23, 0
      %p86 = por %p84, %p85
      %p87 = scmp.ne.s32.totalorder %s75, %s76
      %p88 = scmp.eq.s32.totalorder %s24, 1
      %p89 = por %p87, %p88
      %p91 = scmp.ne.s32.totalorder %s76, %s90
      %p92 = scmp.eq.s32.totalorder %s24, 0
      %p93 = por %p91, %p92
      %s95 = sadd.s32 %s94, 1
      %p98 = scmp.eq.s32.totalorder %s18, 1
      %p99 = scmp.ne.s32.totalorder %s94, %s96
      %p100 = scmp.eq.s32.totalorder %s18, 0
      %p101 = por %p99, %p100
      %p102 = scmp.ne.s32.totalorder %s94, %s96
      %p103 = scmp.eq.s32.totalorder %s23, 1
      %p104 = por %p102, %p103
      %p105 = scmp.ne.s32.totalorder %s96, %s97
      %p106 = scmp.eq.s32.totalorder %s23, 0
      %p107 = por %p105, %p106
      %p108 = scmp.ne.s32.totalorder %s96, %s97
      %p109 = scmp.eq.s32.totalorder %s24, 1
      %p110 = por %p108, %p109
      %p112 = scmp.ne.s32.totalorder %s97, %s111
      %p113 = scmp.eq.s32.totalorder %s24, 0
      %p114 = por %p112, %p113
      %s116 = sadd.s32 %s115, 1
      %p119 = scmp.eq.s32.totalorder %s18, 1
      %p120 = scmp.ne.s32.totalorder %s115, %s117
      %p121 = scmp.eq.s32.totalorder %s18, 0
      %p122 = por %p120, %p121
      %p123 = scmp.ne.s32.totalorder %s115, %s117
      %p124 = scmp.eq.s32.totalorder %s23, 1
      %p125 = por %p123, %p124
      %p126 = scmp.ne.s32.totalorder %s117, %s118
      %p127 = scmp.eq.s32.totalorder %s23, 0
      %p128 = por %p126, %p127
      %p129 = scmp.ne.s32.totalorder %s117, %s118
      %p130 = scmp.eq.s32.totalorder %s24, 1
      %p131 = por %p129, %p130
      %p133 = scmp.ne.s32.totalorder %s118, %s132
      %p134 = scmp.eq.s32.totalorder %s24, 0
      %p135 = por %p133, %p134
      %s136 = ssub.s32 %s18, %s25
      %p137 = scmp.eq.s32.totalorder %s136, 0
      %s139 = sadd.s32 %s138, 1
      %s140 = scalar_select %p137, %s138, %s139
      %p143 = pneg %p137
      %p144 = scmp.eq.s32.totalorder %s18, 1
      %p145 = por %p143, %p144
      %p146 = scmp.ne.s32.totalorder %s138, %s141
      %p147 = scmp.eq.s32.totalorder %s18, 0
      %p148 = por %p146, %p147
      %p149 = scmp.ne.s32.totalorder %s138, %s141
      %p150 = scmp.eq.s32.totalorder %s23, 1
      %p151 = por %p149, %p150
      %p152 = scmp.ne.s32.totalorder %s141, %s142
      %p153 = scmp.eq.s32.totalorder %s23, 0
      %p154 = por %p152, %p153
      %p155 = scmp.ne.s32.totalorder %s141, %s142
      %p156 = scmp.eq.s32.totalorder %s24, 1
      %p157 = por %p155, %p156
      %p159 = scmp.ne.s32.totalorder %s142, %s158
      %p160 = scmp.eq.s32.totalorder %s24, 0
      %p161 = por %p159, %p160
      %p162 = scmp.le.s32.totalorder 1, %s18
      %p163 = scmp.lt.s32.totalorder %s18, 3
      %p164 = pnand %p162, %p163
      %p165 = pneg %p164
      // Predicated region
      $region9: #{tpu_custom_call.1} parent=5 // pred_check
        _
      $region10: #{tpu_custom_call.1} parent=5 // pred_check_branch
        %167 = sbr.rel (%p164) target = $region12
      $region11: #{tpu_custom_call.1} parent=5 // pred_region
        %s168 = ssub.s32 %s18, 1
        // Predicated region
        $region13: #{tpu_custom_call.1} parent=11 // pred_check
          %p169 = pneg %p65
        $region14: #{tpu_custom_call.1} parent=11 // pred_check_branch
          %171 = sbr.rel (%p169) target = $region16
        $region15: #{tpu_custom_call.1} parent=11 // pred_region
          %s173 = ssub.s32 4096, 4096
          %174 = vsyncadd [#allocation6], %s173
          %s175 = sshll.u32 [#allocation5], 4
          %s176 = int_to_ptr.vmem [resolvable:$true] %s175
          %181 = dma.hbm_to_vmem [thread:$0]  %s1, 4096, %s176, [#allocation6], 256, 256, 16
        $region16: #{tpu_custom_call.1} parent=11 // pred_fallthru
          _
        // Predicated region
        $region17: #{tpu_custom_call.1} parent=11 // pred_check
          %p182 = pneg %p86
        $region18: #{tpu_custom_call.1} parent=11 // pred_check_branch
          %184 = sbr.rel (%p182) target = $region20
        $region19: #{tpu_custom_call.1} parent=11 // pred_region
          _
        $region20: #{tpu_custom_call.1} parent=11 // pred_fallthru
          _
        // Predicated region
        $region21: #{tpu_custom_call.1} parent=11 // pred_check
          %p185 = pneg %p107
        $region22: #{tpu_custom_call.1} parent=11 // pred_check_branch
          %187 = sbr.rel (%p185) target = $region24
        $region23: #{tpu_custom_call.1} parent=11 // pred_region
          %s189 = ssub.s32 2048, 2048
          %190 = vsyncadd [#allocation6], %s189
          %s191 = sshll.u32 [#allocation7], 4
          %s192 = int_to_ptr.vmem [resolvable:$true] %s191
          %197 = dma.hbm_to_vmem [thread:$0]  %s3, 2048, %s192, [#allocation6], 128, 128, 8
        $region24: #{tpu_custom_call.1} parent=11 // pred_fallthru
          _
        // Predicated region
        $region25: #{tpu_custom_call.1} parent=11 // pred_check
          %p198 = pneg %p128
        $region26: #{tpu_custom_call.1} parent=11 // pred_check_branch
          %200 = sbr.rel (%p198) target = $region28
        $region27: #{tpu_custom_call.1} parent=11 // pred_region
          _
        $region28: #{tpu_custom_call.1} parent=11 // pred_fallthru
          _
      $region12: #{tpu_custom_call.1} parent=5 // pred_fallthru
        _
      %p201 = scmp.lt.s32.totalorder %s18, 2
      // Predicated region
      $region29: #{tpu_custom_call.1} parent=5 // pred_check
        %p202 = pneg %p201
      $region30: #{tpu_custom_call.1} parent=5 // pred_check_branch
        %204 = sbr.rel (%p202) target = $region32
      $region31: #{tpu_custom_call.1} parent=5 // pred_region
        // Predicated region
        $region33: #{tpu_custom_call.1} parent=31 // pred_check
          %p205 = pneg %p38
        $region34: #{tpu_custom_call.1} parent=31 // pred_check_branch
          %207 = sbr.rel (%p205) target = $region36
        $region35: #{tpu_custom_call.1} parent=31 // pred_region
          %s208 = sand.u32 %s28, 1
          %s209 = scalar_lea.sflag [#allocation3], %s208
          %s210 = sand.u32 %s28, 1
          %s211 = smul.addr %s210, 8
          %s212 = scalar_lea.vmem [#allocation2], %s211
          %s214 = ssub.s32 128, 128
          %215 = vsyncadd %s209, %s214
          %s216 = smul.addr %s18, 128
          %s217 = scalar_lea.hbm %s0, %s216
          %s219 = sshll.u32 %s212, 4
          %s220 = int_to_ptr.vmem [resolvable:$true] %s219
          %222 = dma.hbm_to_vmem [thread:$0]  %s217, 128, %s220, %s209
        $region36: #{tpu_custom_call.1} parent=31 // pred_fallthru
          _
      $region32: #{tpu_custom_call.1} parent=5 // pred_fallthru
        _
      %p223 = scmp.le.s32.totalorder 1, %s18
      %p224 = scmp.lt.s32.totalorder %s18, 3
      %p225 = pnand %p223, %p224
      %p226 = pneg %p225
      // Predicated region
      $region37: #{tpu_custom_call.1} parent=5 // pred_check
        _
      $region38: #{tpu_custom_call.1} parent=5 // pred_check_branch
        %228 = sbr.rel (%p225) target = $region40
      $region39: #{tpu_custom_call.1} parent=5 // pred_region
        %s229 = ssub.s32 %s18, 1
        %s230 = sand.u32 %s31, 1
        %s231 = scalar_lea.sflag [#allocation3], %s230
        %s232 = sand.u32 %s31, 1
        %s233 = smul.addr %s232, 8
        %s234 = scalar_lea.vmem [#allocation2], %s233
        // Predicated region
        $region41: #{tpu_custom_call.1} parent=39 // pred_check
          %p235 = pneg %p44
        $region42: #{tpu_custom_call.1} parent=39 // pred_check_branch
          %237 = sbr.rel (%p235) target = $region44
        $region43: #{tpu_custom_call.1} parent=39 // pred_region
          %238 = dma.done %s231, 128
        $region44: #{tpu_custom_call.1} parent=39 // pred_fallthru
          _
        // Predicated region
        $region45: #{tpu_custom_call.1} parent=39 // pred_check
          %p239 = pneg %p65
        $region46: #{tpu_custom_call.1} parent=39 // pred_check_branch
          %241 = sbr.rel (%p239) target = $region48
        $region47: #{tpu_custom_call.1} parent=39 // pred_region
          %242 = dma.done [#allocation6], 4096
        $region48: #{tpu_custom_call.1} parent=39 // pred_fallthru
          _
        // Predicated region
        $region49: #{tpu_custom_call.1} parent=39 // pred_check
          %p243 = pneg %p107
        $region50: #{tpu_custom_call.1} parent=39 // pred_check_branch
          %245 = sbr.rel (%p243) target = $region52
        $region51: #{tpu_custom_call.1} parent=39 // pred_region
          %246 = dma.done [#allocation6], 2048
        $region52: #{tpu_custom_call.1} parent=39 // pred_fallthru
          _
        %s247 = sand.u32 %s31, 1
        %s248 = scalar_lea.sflag [#allocation3], %s247
        %s249 = sand.u32 %s31, 1
        %s250 = smul.addr %s249, 8
        %s251 = scalar_lea.vmem [#allocation2], %s250
        %p252 = pneg %p44
        %p253 = pneg %p41
        %p254 = pneg %p65
        %p255 = pneg %p62
        %p256 = pneg %p86
        %p257 = pneg %p83
        %p258 = pneg %p107
        %p259 = pneg %p104
        %p260 = pneg %p128
        %p261 = pneg %p125
        %p262 = pneg %p154
        %p263 = pneg %p151
        %s264 = sand.u32 %s141, 1
        %s265 = scalar_lea.sflag [#allocation4], %s264
        %s266 = sand.u32 %s141, 1
        %s267 = smul.addr %s266, 8
        %s268 = scalar_lea.vmem [#allocation8], %s267
        %v269 = vld [vmem:[%s234] sm:$0xff]
        %v270 = vld [vmem:[#allocation5] sm:$0xff]
        %v271 = vld [vmem:[#allocation5 + $0x8] sm:$0xff]
        %v272 = vld [vmem:[#allocation5 + $0x10] sm:$0xff]
        %v273 = vld [vmem:[#allocation5 + $0x18] sm:$0xff]
        %v274 = vld [vmem:[#allocation5 + $0x20] sm:$0xff]
        %v275 = vld [vmem:[#allocation5 + $0x28] sm:$0xff]
        %v276 = vld [vmem:[#allocation5 + $0x30] sm:$0xff]
        %v277 = vld [vmem:[#allocation5 + $0x38] sm:$0xff]
        %v278 = vld [vmem:[#allocation5 + $0x40] sm:$0xff]
        %v279 = vld [vmem:[#allocation5 + $0x48] sm:$0xff]
        %v280 = vld [vmem:[#allocation5 + $0x50] sm:$0xff]
        %v281 = vld [vmem:[#allocation5 + $0x58] sm:$0xff]
        %v282 = vld [vmem:[#allocation5 + $0x60] sm:$0xff]
        %v283 = vld [vmem:[#allocation5 + $0x68] sm:$0xff]
        %v284 = vld [vmem:[#allocation5 + $0x70] sm:$0xff]
        %v285 = vld [vmem:[#allocation5 + $0x78] sm:$0xff]
        %v286 = vld [vmem:[#allocation5 + $0x80] sm:$0xff]
        %v287 = vld [vmem:[#allocation5 + $0x88] sm:$0xff]
        %v288 = vld [vmem:[#allocation5 + $0x90] sm:$0xff]
        %v289 = vld [vmem:[#allocation5 + $0x98] sm:$0xff]
        %v290 = vld [vmem:[#allocation5 + $0xa0] sm:$0xff]
        %v291 = vld [vmem:[#allocation5 + $0xa8] sm:$0xff]
        %v292 = vld [vmem:[#allocation5 + $0xb0] sm:$0xff]
        %v293 = vld [vmem:[#allocation5 + $0xb8] sm:$0xff]
        %v294 = vld [vmem:[#allocation5 + $0xc0] sm:$0xff]
        %v295 = vld [vmem:[#allocation5 + $0xc8] sm:$0xff]
        %v296 = vld [vmem:[#allocation5 + $0xd0] sm:$0xff]
        %v297 = vld [vmem:[#allocation5 + $0xd8] sm:$0xff]
        %v298 = vld [vmem:[#allocation5 + $0xe0] sm:$0xff]
        %v299 = vld [vmem:[#allocation5 + $0xe8] sm:$0xff]
        %v300 = vld [vmem:[#allocation5 + $0xf0] sm:$0xff]
        %v301 = vld [vmem:[#allocation5 + $0xf8] sm:$0xff]
        %v302 = vld [vmem:[%s2] sm:$0x3]
        %v304 = vlaneseq
        %v305 = vshrl.u32 %v304, 7
        %v306 = vsub.s32 0, %v305
        %v307 = vrot.slane %v302, %v306
        %v308 = vlaneseq
        %v309 = vshrl.u32 %v308, 7
        %v310 = vsub.s32 1, %v309
        %v311 = vrot.slane %v302, %v310
        %314 = vmatprep.subr.mxu0 %v301
        %315 = vmatpush1.msra.mxu0 %v300
        %316 = vmatprep.subr.mxu0 %v299
        %317 = vmatpush1.msra.mxu0 %v298
        %318 = vmatprep.subr.mxu0 %v297
        %319 = vmatpush1.msra.mxu0 %v296
        %320 = vmatprep.subr.mxu0 %v295
        %321 = vmatpush1.msra.mxu0 %v294
        %322 = vmatprep.subr.mxu0 %v293
        %323 = vmatpush1.msra.mxu0 %v292
        %324 = vmatprep.subr.mxu0 %v291
        %325 = vmatpush1.msra.mxu0 %v290
        %326 = vmatprep.subr.mxu0 %v289
        %327 = vmatpush1.msra.mxu0 %v288
        %328 = vmatprep.subr.mxu0 %v287
        %329 = vmatpush1.msra.mxu0 %v286
        %330 = vmatprep.subr.mxu0 %v285
        %331 = vmatpush1.msra.mxu0 %v284
        %332 = vmatprep.subr.mxu0 %v283
        %333 = vmatpush1.msra.mxu0 %v282
        %334 = vmatprep.subr.mxu0 %v281
        %335 = vmatpush1.msra.mxu0 %v280
        %336 = vmatprep.subr.mxu0 %v279
        %337 = vmatpush1.msra.mxu0 %v278
        %338 = vmatprep.subr.mxu0 %v277
        %339 = vmatpush1.msra.mxu0 %v276
        %340 = vmatprep.subr.mxu0 %v275
        %341 = vmatpush1.msra.mxu0 %v274
        %342 = vmatprep.subr.mxu0 %v273
        %343 = vmatpush1.msra.mxu0 %v272
        %344 = vmatprep.subr.mxu0 %v271
        %345 = vmatpush1.msra.mxu0 %v270
        %346 = vmatprep.subr.mxu0 0.0
        %347 = vmatpush2.msra.mxu0 0.0
        %348 = vmatprep.subr.mxu0 0.0
        %349 = vmatpush2.msra.mxu0 0.0
        %350 = vmatprep.subr.mxu0 0.0
        %351 = vmatpush2.msra.mxu0 0.0
        %352 = vmatprep.subr.mxu0 0.0
        %353 = vmatpush2.msra.mxu0 0.0
        %354 = vmatprep.subr.mxu0 0.0
        %355 = vmatpush2.msra.mxu0 0.0
        %356 = vmatprep.subr.mxu0 0.0
        %357 = vmatpush2.msra.mxu0 0.0
        %358 = vmatprep.subr.mxu0 0.0
        %359 = vmatpush2.msra.mxu0 0.0
        %360 = vmatprep.subr.mxu0 0.0
        %361 = vmatpush2.msra.mxu0 0.0
        %362 = vmatprep.subr.mxu0 0.0
        %363 = vmatpush2.msra.mxu0 0.0
        %364 = vmatprep.subr.mxu0 0.0
        %365 = vmatpush2.msra.mxu0 0.0
        %366 = vmatprep.subr.mxu0 0.0
        %367 = vmatpush2.msra.mxu0 0.0
        %368 = vmatprep.subr.mxu0 0.0
        %369 = vmatpush2.msra.mxu0 0.0
        %370 = vmatprep.subr.mxu0 0.0
        %371 = vmatpush2.msra.mxu0 0.0
        %372 = vmatprep.subr.mxu0 0.0
        %373 = vmatpush2.msra.mxu0 0.0
        %374 = vmatprep.subr.mxu0 0.0
        %375 = vmatpush2.msra.mxu0 0.0
        %376 = vmatprep.subr.mxu0 0.0
        %377 = vmatpush2.msra.mxu0 0.0
        %378 = vmatprep.mubr.f32.mxu0 0.0
        %379 = vmatmul.mubr.f32.gmra.mxu0 %v269
        %v380 = vpop.f32.mrf.mxu0
        %v381 = vadd.f32 %v307, %v380
        %v382 = vpop.f32.mrf.mxu0
        %v383 = vadd.f32 %v311, %v382
        %384 = vdwg.mxu0
        %v385 = vmul.f32 %v381, 0.5
        %v386 = vmul.f32 %v381, 0.044715
        %v387 = vmul.f32 %v386, %v381
        %v388 = vmul.f32 %v387, %v381
        %v389 = vadd.f32 %v381, %v388
        %v390 = vmul.f32 %v389, 0.7978846
        %v391 = vtanh.pop %v390
        %v392 = vadd.f32 %v391, 1.0
        %v393 = vmul.f32 %v385, %v392
        %v394 = vmul.f32 %v393, %v383
        %v395 = vld [vmem:[#allocation7] sm:$0xff]
        %v396 = vld [vmem:[#allocation7 + $0x8] sm:$0xff]
        %v397 = vld [vmem:[#allocation7 + $0x10] sm:$0xff]
        %v398 = vld [vmem:[#allocation7 + $0x18] sm:$0xff]
        %v399 = vld [vmem:[#allocation7 + $0x20] sm:$0xff]
        %v400 = vld [vmem:[#allocation7 + $0x28] sm:$0xff]
        %v401 = vld [vmem:[#allocation7 + $0x30] sm:$0xff]
        %v402 = vld [vmem:[#allocation7 + $0x38] sm:$0xff]
        %v403 = vld [vmem:[#allocation7 + $0x40] sm:$0xff]
        %v404 = vld [vmem:[#allocation7 + $0x48] sm:$0xff]
        %v405 = vld [vmem:[#allocation7 + $0x50] sm:$0xff]
        %v406 = vld [vmem:[#allocation7 + $0x58] sm:$0xff]
        %v407 = vld [vmem:[#allocation7 + $0x60] sm:$0xff]
        %v408 = vld [vmem:[#allocation7 + $0x68] sm:$0xff]
        %v409 = vld [vmem:[#allocation7 + $0x70] sm:$0xff]
        %v410 = vld [vmem:[#allocation7 + $0x78] sm:$0xff]
        %v411 = vld [vmem:[%s4] sm:$0x1]
        %v413 = vlaneseq
        %v414 = vshrl.u32 %v413, 7
        %v415 = vsub.s32 0, %v414
        %v416 = vrot.slane %v411, %v415
        %418 = vmatprep.subr.mxu0 0.0
        %419 = vmatpush1.msra.mxu0 %v410
        %420 = vmatprep.subr.mxu0 0.0
        %421 = vmatpush1.msra.mxu0 %v409
        %422 = vmatprep.subr.mxu0 0.0
        %423 = vmatpush1.msra.mxu0 %v408
        %424 = vmatprep.subr.mxu0 0.0
        %425 = vmatpush1.msra.mxu0 %v407
        %426 = vmatprep.subr.mxu0 0.0
        %427 = vmatpush1.msra.mxu0 %v406
        %428 = vmatprep.subr.mxu0 0.0
        %429 = vmatpush1.msra.mxu0 %v405
        %430 = vmatprep.subr.mxu0 0.0
        %431 = vmatpush1.msra.mxu0 %v404
        %432 = vmatprep.subr.mxu0 0.0
        %433 = vmatpush1.msra.mxu0 %v403
        %434 = vmatprep.subr.mxu0 0.0
        %435 = vmatpush1.msra.mxu0 %v402
        %436 = vmatprep.subr.mxu0 0.0
        %437 = vmatpush1.msra.mxu0 %v401
        %438 = vmatprep.subr.mxu0 0.0
        %439 = vmatpush1.msra.mxu0 %v400
        %440 = vmatprep.subr.mxu0 0.0
        %441 = vmatpush1.msra.mxu0 %v399
        %442 = vmatprep.subr.mxu0 0.0
        %443 = vmatpush1.msra.mxu0 %v398
        %444 = vmatprep.subr.mxu0 0.0
        %445 = vmatpush1.msra.mxu0 %v397
        %446 = vmatprep.subr.mxu0 0.0
        %447 = vmatpush1.msra.mxu0 %v396
        %448 = vmatprep.subr.mxu0 0.0
        %449 = vmatpush1.msra.mxu0 %v395
        %450 = vmatprep.subr.mxu0 0.0
        %451 = vmatpush2.msra.mxu0 0.0
        %452 = vmatprep.subr.mxu0 0.0
        %453 = vmatpush2.msra.mxu0 0.0
        %454 = vmatprep.subr.mxu0 0.0
        %455 = vmatpush2.msra.mxu0 0.0
        %456 = vmatprep.subr.mxu0 0.0
        %457 = vmatpush2.msra.mxu0 0.0
        %458 = vmatprep.subr.mxu0 0.0
        %459 = vmatpush2.msra.mxu0 0.0
        %460 = vmatprep.subr.mxu0 0.0
        %461 = vmatpush2.msra.mxu0 0.0
        %462 = vmatprep.subr.mxu0 0.0
        %463 = vmatpush2.msra.mxu0 0.0
        %464 = vmatprep.subr.mxu0 0.0
        %465 = vmatpush2.msra.mxu0 0.0
        %466 = vmatprep.subr.mxu0 0.0
        %467 = vmatpush2.msra.mxu0 0.0
        %468 = vmatprep.subr.mxu0 0.0
        %469 = vmatpush2.msra.mxu0 0.0
        %470 = vmatprep.subr.mxu0 0.0
        %471 = vmatpush2.msra.mxu0 0.0
        %472 = vmatprep.subr.mxu0 0.0
        %473 = vmatpush2.msra.mxu0 0.0
        %474 = vmatprep.subr.mxu0 0.0
        %475 = vmatpush2.msra.mxu0 0.0
        %476 = vmatprep.subr.mxu0 0.0
        %477 = vmatpush2.msra.mxu0 0.0
        %478 = vmatprep.subr.mxu0 0.0
        %479 = vmatpush2.msra.mxu0 0.0
        %480 = vmatprep.subr.mxu0 0.0
        %481 = vmatpush2.msra.mxu0 0.0
        %482 = vmatprep.mubr.f32.mxu0 0.0
        %483 = vmatmul.mubr.f32.gmra.mxu0 %v394
        %v484 = vpop.f32.mrf.mxu0
        %v485 = vadd.f32 %v416, %v484
        %v486 = vpop.f32.mrf.mxu0
        %487 = vdwg.mxu0
        %488 = vst [vmem:[%s268] sm:$0xff] %v485
        %s489 = sand.u32 %s141, 1
        %s490 = scalar_lea.sflag [#allocation4], %s489
        %s491 = sand.u32 %s141, 1
        %s492 = smul.addr %s491, 8
        %s493 = scalar_lea.vmem [#allocation8], %s492
        // Predicated region
        $region53: #{tpu_custom_call.1} parent=39 // pred_check
          %p494 = pneg %p151
        $region54: #{tpu_custom_call.1} parent=39 // pred_check_branch
          %496 = sbr.rel (%p494) target = $region56
        $region55: #{tpu_custom_call.1} parent=39 // pred_region
          %s498 = ssub.s32 128, 128
          %499 = vsyncadd %s490, %s498
          %s500 = smul.addr %s23, 128
          %s501 = scalar_lea.hbm %s5, %s500
          %s503 = sshll.u32 %s493, 4
          %s504 = int_to_ptr.vmem [resolvable:$true] %s503
          %506 = dma.vmem_to_hbm [thread:$0]  %s504, 128, %s501, %s490
        $region56: #{tpu_custom_call.1} parent=39 // pred_fallthru
          _
      $region40: #{tpu_custom_call.1} parent=5 // pred_fallthru
        _
      %p507 = scmp.le.s32.totalorder 2, %s18
      // Predicated region
      $region57: #{tpu_custom_call.1} parent=5 // pred_check
        %p508 = pneg %p507
      $region58: #{tpu_custom_call.1} parent=5 // pred_check_branch
        %510 = sbr.rel (%p508) target = $region60
      $region59: #{tpu_custom_call.1} parent=5 // pred_region
        %s511 = ssub.s32 %s18, 2
        // Predicated region
        $region61: #{tpu_custom_call.1} parent=59 // pred_check
          %p512 = pneg %p157
        $region62: #{tpu_custom_call.1} parent=59 // pred_check_branch
          %514 = sbr.rel (%p512) target = $region64
        $region63: #{tpu_custom_call.1} parent=59 // pred_region
          %s515 = sand.u32 %s142, 1
          %s516 = scalar_lea.sflag [#allocation4], %s515
          %s517 = sand.u32 %s142, 1
          %s518 = smul.addr %s517, 8
          %s519 = scalar_lea.vmem [#allocation8], %s518
          %520 = dma.done %s516, 128
        $region64: #{tpu_custom_call.1} parent=59 // pred_fallthru
          _
      $region60: #{tpu_custom_call.1} parent=5 // pred_fallthru
        _
    $region6: #{tpu_custom_call.1} parent=1 // loop_footer
      %s22 = sadd.s32 1, %s18
    $region7: #{tpu_custom_call.1} parent=1 // loop_footer_branch
      %17 = sbr.rel target = $region3
    $region8: #{tpu_custom_call.1} parent=1 // loop_exit
      _
    %521 = vsyncpa [#allocation3], 1
    %s522 = scalar_lea.sflag [#allocation3], 1
    %523 = vsyncpa %s522, 1
    %524 = vsyncpa [#allocation6], 1
    %525 = vsyncpa [#allocation4], 1
    %s526 = scalar_lea.sflag [#allocation4], 1
    %527 = vsyncpa %s526, 1

</llo_original>
